<compile_context>
chip_gen: v7x
topology: tpu7x:2x2x1
jax: 0.10.0
libtpu: 0.0.40
codegen_flags: <defaults>
</compile_context>

<pallas_src>
import functools
import math

import jax
import jax.numpy as jnp
import numpy as np
from jax.experimental import pallas as pl
from jax.experimental.pallas import tpu as pltpu


def _interp_matrix(out_size: int, in_size: int, align_corners: bool) -> jnp.ndarray:
    """1-D linear interpolation matrix (out_size, in_size) matching PyTorch
    F.interpolate(mode='bilinear') semantics."""
    dst = np.arange(out_size, dtype=np.float64)
    if align_corners:
        src = dst * (in_size - 1) / (out_size - 1) if out_size > 1 else np.zeros_like(dst)
    else:
        src = (dst + 0.5) * (in_size / out_size) - 0.5
    src = np.clip(src, 0.0, in_size - 1)
    lo = np.floor(src).astype(np.int64)
    hi = np.minimum(lo + 1, in_size - 1)
    w_hi = src - lo
    w_lo = 1.0 - w_hi
    m = np.zeros((out_size, in_size), dtype=np.float64)
    m[np.arange(out_size), lo] += w_lo
    m[np.arange(out_size), hi] += w_hi
    return jnp.asarray(m, dtype=jnp.float32)


def _upsample2x_kernel(awt_ref, x_ref, o_ref, *, h_in: int):
    # awt_ref: (W_in, W_out)        column interpolation matrix, transposed
    # x_ref  : (TB*H_in, W_in)      TB flattened (n, c) slices
    # o_ref  : (TB*H_in, 2*W_out)   row j = [output row 2i ; output row 2i+1]
    x = x_ref[...].astype(jnp.float32)
    # W interpolation: one large lane-dense MXU matmul.
    t = jnp.dot(x, awt_ref[...], preferred_element_type=jnp.float32)  # (R, W_out)
    r, w_out = t.shape

    # H interpolation (scale 2, align_corners=False): constant 2-tap blend of
    # neighboring rows. Shift rows on the XLU; clamp at each slice's edges.
    up = pltpu.roll(t, shift=1, axis=0)        # row i-1 (wrap rows masked below)
    dn = pltpu.roll(t, shift=r - 1, axis=0)    # row i+1 (== shift -1 mod r)
    pos = jax.lax.rem(jax.lax.broadcasted_iota(jnp.int32, (r, w_out), 0), h_in)
    up = jnp.where(pos == 0, t, up)            # top edge of each slice
    dn = jnp.where(pos == h_in - 1, t, dn)     # bottom edge of each slice

    even = 0.25 * up + 0.75 * t                # output rows 2i
    odd = 0.75 * t + 0.25 * dn                 # output rows 2i + 1
    o_ref[...] = jnp.concatenate([even, odd], axis=-1).astype(o_ref.dtype)


def _choose_block_slices(b: int, h_in: int, w_in: int, w_out: int) -> int:
    """How many (n, c) slices to process per grid step."""
    # Block sublane count (tb * h_in) must be a multiple of 8.
    step = 8 // math.gcd(h_in, 8)
    # f32 working set per slice: double-buffered in/out blocks + temporaries.
    work = (2 * (h_in * w_in + 2 * h_in * w_out) + 4 * h_in * w_out) * 4
    budget = 20 * 1024 * 1024                  # stays under the 32 MiB limit below
    tb_cap = max(1, budget // work)
    # Prefer >= 2 grid steps when the batch allows (v7x: 2 TensorCores).
    num_blocks = max(2 if b > step else 1, pl.cdiv(b, tb_cap))
    tb = pl.cdiv(pl.cdiv(b, num_blocks), step) * step
    return int(tb)


@functools.partial(jax.jit, static_argnames=("scale_factor", "mode", "align_corners"))
def interpolate_module(x, *, scale_factor=2, mode="bilinear", align_corners=False):
    """Pallas equivalent of InterpolateModule.forward for NCHW input."""
    assert mode == "bilinear", "only bilinear mode is implemented"
    assert not align_corners, "only align_corners=False is implemented"
    assert int(scale_factor) == 2, "fast path is specialized to scale_factor=2"
    # TODO(synk): general scale factors / align_corners=True would need the full
    # (H_out, H_in) interpolation-matrix path instead of the constant 2-tap blend.

    n, c, h_in, w_in = x.shape
    h_out, w_out = 2 * h_in, 2 * w_in

    awt = _interp_matrix(w_out, w_in, align_corners).T        # (W_in, W_out) f32

    b = n * c
    tb = _choose_block_slices(b, h_in, w_in, w_out)
    num_blocks = pl.cdiv(b, tb)
    b_pad = num_blocks * tb

    xb = x.reshape(b, h_in, w_in)
    if b_pad > b:
        xb = jnp.pad(xb, ((0, b_pad - b), (0, 0), (0, 0)))
    x2 = xb.reshape(b_pad * h_in, w_in)                       # contiguous -> free

    itemsize = jnp.dtype(x.dtype).itemsize
    cost = pl.CostEstimate(
        flops=2 * b * h_in * w_in * w_out + 6 * b * h_in * w_out,
        transcendentals=0,
        bytes_accessed=(b * h_in * w_in + b * h_out * w_out) * itemsize
        + w_in * w_out * 4,
    )

    out2 = pl.pallas_call(
        functools.partial(_upsample2x_kernel, h_in=h_in),
        out_shape=jax.ShapeDtypeStruct((b_pad * h_in, 2 * w_out), x.dtype),
        grid=(num_blocks,),
        in_specs=[
            pl.BlockSpec((w_in, w_out), lambda i: (0, 0)),            # AwT (VMEM resident)
            pl.BlockSpec((tb * h_in, w_in), lambda i: (i, 0)),        # TB input slices
        ],
        out_specs=pl.BlockSpec((tb * h_in, 2 * w_out), lambda i: (i, 0)),
        compiler_params=pltpu.CompilerParams(
            dimension_semantics=("parallel",),
            vmem_limit_bytes=32 * 1024 * 1024,
        ),
        cost_estimate=cost,
    )(awt, x2)

    out = out2.reshape(b_pad, h_out, w_out)[:b].reshape(n, c, h_out, w_out)
    return out


def _reference(x, scale=2):
    n, c, h, w = x.shape
    ah = _interp_matrix(h * scale, h, False)
    aw = _interp_matrix(w * scale, w, False)
    return jnp.einsum("oh,nchw,pw->ncop", ah, x, aw,
                      precision=jax.lax.Precision.HIGHEST)


if __name__ == "__main__":
    key = jax.random.PRNGKey(0)

    # Small NCHW input consistent with the module's use inside YOLACT's
    # protonet (scale_factor=2, mode='bilinear', align_corners=False).
    x = jax.random.normal(key, (2, 4, 16, 16), dtype=jnp.float32)
    y = jax.block_until_ready(interpolate_module(x))
    assert y.shape == (2, 4, 32, 32)
    np.testing.assert_allclose(np.asarray(y), np.asarray(_reference(x)),
                               rtol=1e-5, atol=1e-5)

    # Unaligned-H / batch-tail case (exercises the zero-padding path).
    x_tail = jax.random.normal(jax.random.PRNGKey(0), (1, 3, 10, 12), dtype=jnp.float32)
    y_tail = jax.block_until_ready(interpolate_module(x_tail))
    assert y_tail.shape == (1, 3, 20, 24)
    np.testing.assert_allclose(np.asarray(y_tail), np.asarray(_reference(x_tail)),
                               rtol=1e-5, atol=1e-5)

    print("KERNEL_OK")
</pallas_src>

<mosaic_0001>
module attributes {stable_mosaic.version = 11 : i64} {
  func.func @_upsample2x_kernel(%arg0: i32, %arg1: memref<16x32xf32, #tpu.memory_space<vmem>>, %arg2: memref<64x16xf32, #tpu.memory_space<vmem>>, %arg3: memref<64x64xf32, #tpu.memory_space<vmem>>) attributes {dimension_semantics = [#tpu.dimension_semantics<parallel>], iteration_bounds = array<i64: 2>, scalar_prefetch = 0 : i64, scratch_operands = 0 : i64, tpu.core_type = #tpu.core_type<tc>, window_params = [{pipeline_mode = #tpu.pipeline_mode<synchronous>, transform_indices = @transform_0, window_bounds = array<i64: 16, 32>}, {transform_indices = @transform_1, window_bounds = array<i64: 64, 16>}, {transform_indices = @transform_2, window_bounds = array<i64: 64, 64>}]} {
    %c0 = arith.constant 0 : index
    %c0_0 = arith.constant 0 : index
    %0 = vector.load %arg2[%c0, %c0_0] : memref<64x16xf32, #tpu.memory_space<vmem>>, vector<64x16xf32>
    %c0_1 = arith.constant 0 : index
    %c0_2 = arith.constant 0 : index
    %1 = vector.load %arg1[%c0_1, %c0_2] : memref<16x32xf32, #tpu.memory_space<vmem>>, vector<16x32xf32>
    %cst = arith.constant dense<0.000000e+00> : vector<64x32xf32>
    %2 = tpu.matmul %0, %1, %cst {dimension_numbers = #tpu.dot_dimension_numbers<[1], [0], [0], [1], [0, 0, 1, 1], [], []>} : vector<64x16xf32>, vector<16x32xf32>, vector<64x32xf32> -> vector<64x32xf32>
    %c1_i32 = arith.constant 1 : i32
    %3 = tpu.dynamic_rotate %2 by %c1_i32 dim 0 : vector<64x32xf32>, i32 -> vector<64x32xf32>
    %c63_i32 = arith.constant 63 : i32
    %4 = tpu.dynamic_rotate %2 by %c63_i32 dim 0 : vector<64x32xf32>, i32 -> vector<64x32xf32>
    %5 = tpu.iota {dimensions = array<i32: 0>} : vector<64x32xi32>
    %c16_i32 = arith.constant 16 : i32
    %6 = vector.broadcast %c16_i32 : i32 to vector<64x32xi32>
    %7 = arith.remsi %5, %6 : vector<64x32xi32>
    %c0_i32 = arith.constant 0 : i32
    %8 = vector.broadcast %c0_i32 : i32 to vector<64x32xi32>
    %9 = arith.cmpi eq, %7, %8 : vector<64x32xi32>
    %10 = arith.select %9, %2, %3 : vector<64x32xi1>, vector<64x32xf32>
    %c15_i32 = arith.constant 15 : i32
    %11 = vector.broadcast %c15_i32 : i32 to vector<64x32xi32>
    %12 = arith.cmpi eq, %7, %11 : vector<64x32xi32>
    %13 = arith.select %12, %2, %4 : vector<64x32xi1>, vector<64x32xf32>
    %cst_3 = arith.constant 2.500000e-01 : f32
    %14 = vector.broadcast %cst_3 : f32 to vector<64x32xf32>
    %15 = arith.mulf %14, %10 : vector<64x32xf32>
    %cst_4 = arith.constant 7.500000e-01 : f32
    %16 = vector.broadcast %cst_4 : f32 to vector<64x32xf32>
    %17 = arith.mulf %16, %2 : vector<64x32xf32>
    %18 = arith.addf %15, %17 : vector<64x32xf32>
    %cst_5 = arith.constant 7.500000e-01 : f32
    %19 = vector.broadcast %cst_5 : f32 to vector<64x32xf32>
    %20 = arith.mulf %19, %2 : vector<64x32xf32>
    %cst_6 = arith.constant 2.500000e-01 : f32
    %21 = vector.broadcast %cst_6 : f32 to vector<64x32xf32>
    %22 = arith.mulf %21, %13 : vector<64x32xf32>
    %23 = arith.addf %20, %22 : vector<64x32xf32>
    %24 = tpu.concatenate %18, %23 in 1 : vector<64x32xf32>, vector<64x32xf32> -> vector<64x64xf32>
    %c0_7 = arith.constant 0 : index
    %c0_8 = arith.constant 0 : index
    %25 = vector.load %arg3[%c0_7, %c0_8] : memref<64x64xf32, #tpu.memory_space<vmem>>, vector<64x64xf32>
    tpu.vector_store %arg3[%c0_7, %c0_8], %24 {strides = array<i32>} : memref<64x64xf32, #tpu.memory_space<vmem>>, vector<64x64xf32>,
    return
  }
  func.func @transform_0(%arg0: i32) -> (i32, i32) {
    %c0_i32 = arith.constant 0 : i32
    %c0_i32_0 = arith.constant 0 : i32
    %c0_i32_1 = arith.constant 0 : i32
    return %c0_i32, %c0_i32_0 : i32, i32
  }
  func.func @transform_1(%arg0: i32) -> (i32, i32) {
    %c0_i32 = arith.constant 0 : i32
    %c0_i32_0 = arith.constant 0 : i32
    return %arg0, %c0_i32 : i32, i32
  }
  func.func @transform_2(%arg0: i32) -> (i32, i32) {
    %c0_i32 = arith.constant 0 : i32
    %c0_i32_0 = arith.constant 0 : i32
    return %arg0, %c0_i32 : i32, i32
  }
}

</mosaic_0001>

<llo_original>
// kernel: interpolate_module.1
$region0: #{interpolate_module.1}
  #allocation0 [shape = 'u32[]', space=smem, size = 0x4, offset = 0x4, fixed_abs, tag = 'smem constant byte address 0x4 - core index']
  #allocation1 [shape = 'u32[144,128]{1,0:T(1,128)}', space=vmem, size = 0x12000, scoped, tag = 'internal scratch']
  %s0 = inlined_call_operand.hbm [shape: f32[16,32], index: 0, kind: input, shape index: {}]
  %s1 = inlined_call_operand.hbm [shape: f32[128,16], index: 1, kind: input, shape index: {}]
  %s2 = inlined_call_operand.vmem [shape: f32[128,64], index: 2, kind: output, shape index: {}]
  %s3 = sld [smem:[#allocation0]]
  $region49: #{interpolate_module.1} parent=0
    _
  %s5 = ssub.s32 1, %s3
  %s6 = scalar_select 0, %s5, %s3
  $region1: #{interpolate_module.1} parent=0
    #allocation2 [shape = 'u8[8192]{0}', space=vmem, size = 0x2000, scoped, tag = 'input window, operand 0, single buffered']
    #allocation3 [shape = 's32[2]{0}', space=sflag, size = 0x8, scoped, tag = 'scoped memory for interpolate_module.1']
    #allocation4 [shape = 'u8[65536]{0}', space=vmem, size = 0x10000, scoped, tag = 'input window, operand 1']
    #allocation5 [shape = 's32[2]{0}', space=sflag, size = 0x8, scoped, tag = 'scoped memory for interpolate_module.1']
    %7 = vsyncpa [#allocation3], 0
    %8 = vsyncpa [#allocation5], 0
    %s9 = scalar_lea.sflag [#allocation5], 1
    %10 = vsyncpa %s9, 0
    loop: start=0, step=1, limit=4
    $region2: #{interpolate_module.1} parent=1 // loop_pre_header
      _
    $region3: #{interpolate_module.1} parent=1 // loop_header
      %s12 = sphi 0, %s16
      %p13 = scmp.ge.s32.totalorder %s12, 4
      %s20 = sphi 0, %s20
      %s22 = sphi 0, %s20
      %s23 = sphi 0, %s22
      %s37 = sphi 0, %s23
      %s43 = sphi 0, %s45
      %s46 = sphi 0, %s43
      %s47 = sphi 0, %s46
      %s63 = sphi 0, %s47
      %s69 = sphi 0, %s71
      %s72 = sphi 0, %s69
      %s73 = sphi 0, %s72
      %s89 = sphi 0, %s73
    $region4: #{interpolate_module.1} parent=1 // loop_header_branch
      %15 = sbr.rel (%p13) target = $region8
    $region5: #{interpolate_module.1} parent=1 // loop_body
      %s17 = ssub.s32 %s12, 1
      %s18 = ssub.s32 %s12, 2
      %s19 = sadd.s32 %s12, 1
      %s21 = sadd.s32 %s20, 1
      %p24 = scmp.eq.s32.totalorder %s12, 1
      %p25 = scmp.ne.s32.totalorder %s20, %s22
      %p26 = scmp.eq.s32.totalorder %s12, 0
      %p27 = por %p25, %p26
      %p28 = scmp.ne.s32.totalorder %s20, %s22
      %p29 = scmp.eq.s32.totalorder %s17, 1
      %p30 = por %p28, %p29
      %p31 = scmp.ne.s32.totalorder %s22, %s23
      %p32 = scmp.eq.s32.totalorder %s17, 0
      %p33 = por %p31, %p32
      %p34 = scmp.ne.s32.totalorder %s22, %s23
      %p35 = scmp.eq.s32.totalorder %s18, 1
      %p36 = por %p34, %p35
      %p38 = scmp.ne.s32.totalorder %s23, %s37
      %p39 = scmp.eq.s32.totalorder %s18, 0
      %p40 = por %p38, %p39
      %s41 = ssub.s32 %s12, %s19
      %p42 = scmp.eq.s32.totalorder %s41, 0
      %s44 = sadd.s32 %s43, 1
      %s45 = scalar_select %p42, %s43, %s44
      %p48 = pneg %p42
      %p49 = scmp.eq.s32.totalorder %s12, 1
      %p50 = por %p48, %p49
      %p51 = scmp.ne.s32.totalorder %s43, %s46
      %p52 = scmp.eq.s32.totalorder %s12, 0
      %p53 = por %p51, %p52
      %p54 = scmp.ne.s32.totalorder %s43, %s46
      %p55 = scmp.eq.s32.totalorder %s17, 1
      %p56 = por %p54, %p55
      %p57 = scmp.ne.s32.totalorder %s46, %s47
      %p58 = scmp.eq.s32.totalorder %s17, 0
      %p59 = por %p57, %p58
      %p60 = scmp.ne.s32.totalorder %s46, %s47
      %p61 = scmp.eq.s32.totalorder %s18, 1
      %p62 = por %p60, %p61
      %p64 = scmp.ne.s32.totalorder %s47, %s63
      %p65 = scmp.eq.s32.totalorder %s18, 0
      %p66 = por %p64, %p65
      %s67 = ssub.s32 %s12, %s19
      %p68 = scmp.eq.s32.totalorder %s67, 0
      %s70 = sadd.s32 %s69, 1
      %s71 = scalar_select %p68, %s69, %s70
      %p74 = pneg %p68
      %p75 = scmp.eq.s32.totalorder %s12, 1
      %p76 = por %p74, %p75
      %p77 = scmp.ne.s32.totalorder %s69, %s72
      %p78 = scmp.eq.s32.totalorder %s12, 0
      %p79 = por %p77, %p78
      %p80 = scmp.ne.s32.totalorder %s69, %s72
      %p81 = scmp.eq.s32.totalorder %s17, 1
      %p82 = por %p80, %p81
      %p83 = scmp.ne.s32.totalorder %s72, %s73
      %p84 = scmp.eq.s32.totalorder %s17, 0
      %p85 = por %p83, %p84
      %p86 = scmp.ne.s32.totalorder %s72, %s73
      %p87 = scmp.eq.s32.totalorder %s18, 1
      %p88 = por %p86, %p87
      %p90 = scmp.ne.s32.totalorder %s73, %s89
      %p91 = scmp.eq.s32.totalorder %s18, 0
      %p92 = por %p90, %p91
      %p93 = scmp.le.s32.totalorder 1, %s12
      %p94 = scmp.lt.s32.totalorder %s12, 3
      %p95 = pnand %p93, %p94
      %p96 = pneg %p95
      // Predicated region
      $region9: #{interpolate_module.1} parent=5 // pred_check
        _
      $region10: #{interpolate_module.1} parent=5 // pred_check_branch
        %98 = sbr.rel (%p95) target = $region12
      $region11: #{interpolate_module.1} parent=5 // pred_region
        %s99 = ssub.s32 %s12, 1
        // Predicated region
        $region13: #{interpolate_module.1} parent=11 // pred_check
          %p100 = pneg %p33
        $region14: #{interpolate_module.1} parent=11 // pred_check_branch
          %102 = sbr.rel (%p100) target = $region16
        $region15: #{interpolate_module.1} parent=11 // pred_region
          %s104 = ssub.s32 256, 256
          %105 = vsyncadd [#allocation3], %s104
          %s106 = sshll.u32 [#allocation2], 4
          %s107 = int_to_ptr.vmem [resolvable:$true] %s106
          %112 = dma.hbm_to_vmem [thread:$0]  %s0, 256, %s107, [#allocation3], 128, 128, 8
        $region16: #{interpolate_module.1} parent=11 // pred_fallthru
          _
      $region12: #{interpolate_module.1} parent=5 // pred_fallthru
        _
      %p113 = scmp.lt.s32.totalorder %s12, 2
      // Predicated region
      $region17: #{interpolate_module.1} parent=5 // pred_check
        %p114 = pneg %p113
      $region18: #{interpolate_module.1} parent=5 // pred_check_branch
        %116 = sbr.rel (%p114) target = $region20
      $region19: #{interpolate_module.1} parent=5 // pred_region
        // Predicated region
        $region21: #{interpolate_module.1} parent=19 // pred_check
          %p117 = pneg %p53
        $region22: #{interpolate_module.1} parent=19 // pred_check_branch
          %119 = sbr.rel (%p117) target = $region24
        $region23: #{interpolate_module.1} parent=19 // pred_region
          %s120 = sand.u32 %s43, 1
          %s121 = scalar_lea.sflag [#allocation5], %s120
          %s122 = sand.u32 %s43, 1
          %s123 = smul.addr %s122, 64
          %s124 = scalar_lea.vmem [#allocation4], %s123
          %s125 = smul.u32 8, %s12
          %s127 = ssub.s32 1024, 1024
          %128 = vsyncadd %s121, %s127
          %s129 = smul.addr %s125, 128
          %s130 = scalar_lea.hbm %s1, %s129
          %s131 = sshll.u32 %s124, 4
          %s132 = int_to_ptr.vmem [resolvable:$true] %s131
          %137 = dma.hbm_to_vmem [thread:$0]  %s130, 1024, %s132, %s121, 128, 128, 8
        $region24: #{interpolate_module.1} parent=19 // pred_fallthru
          _
      $region20: #{interpolate_module.1} parent=5 // pred_fallthru
        _
      %p138 = scmp.le.s32.totalorder 1, %s12
      %p139 = scmp.lt.s32.totalorder %s12, 3
      %p140 = pnand %p138, %p139
      %p141 = pneg %p140
      // Predicated region
      $region25: #{interpolate_module.1} parent=5 // pred_check
        _
      $region26: #{interpolate_module.1} parent=5 // pred_check_branch
        %143 = sbr.rel (%p140) target = $region28
      $region27: #{interpolate_module.1} parent=5 // pred_region
        %s144 = ssub.s32 %s12, 1
        // Predicated region
        $region29: #{interpolate_module.1} parent=27 // pred_check
          %p145 = pneg %p33
        $region30: #{interpolate_module.1} parent=27 // pred_check_branch
          %147 = sbr.rel (%p145) target = $region32
        $region31: #{interpolate_module.1} parent=27 // pred_region
          %148 = dma.done [#allocation3], 256
        $region32: #{interpolate_module.1} parent=27 // pred_fallthru
          _
        %s149 = sand.u32 %s46, 1
        %s150 = scalar_lea.sflag [#allocation5], %s149
        %s151 = sand.u32 %s46, 1
        %s152 = smul.addr %s151, 64
        %s153 = scalar_lea.vmem [#allocation4], %s152
        // Predicated region
        $region33: #{interpolate_module.1} parent=27 // pred_check
          %p154 = pneg %p59
        $region34: #{interpolate_module.1} parent=27 // pred_check_branch
          %156 = sbr.rel (%p154) target = $region36
        $region35: #{interpolate_module.1} parent=27 // pred_region
          %157 = dma.done %s150, 1024
        $region36: #{interpolate_module.1} parent=27 // pred_fallthru
          _
        %p158 = pneg %p33
        %p159 = pneg %p30
        %s160 = sand.u32 %s46, 1
        %s161 = scalar_lea.sflag [#allocation5], %s160
        %s162 = sand.u32 %s46, 1
        %s163 = smul.addr %s162, 64
        %s164 = scalar_lea.vmem [#allocation4], %s163
        %p165 = pneg %p59
        %p166 = pneg %p56
        %p167 = pneg %p85
        %p168 = pneg %p82
        %s169 = smul.u32 8, %s17
        %p170 = scmp.lt.s32.totalorder %s169, 15
        %s171 = scalar_select %p170, %s169, 15
        %s172 = smul.addr %s171, 8
        %s173 = scalar_lea.vmem %s2, %s172
        %s174 = smul.u32 8, %s17
        %s175 = smul.u32 8, %s17
        %p176 = scmp.lt.s32.totalorder %s175, 15
        %s177 = scalar_select %p176, %s175, 15
        %s178 = smul.addr %s177, 8
        %s179 = scalar_lea.vmem %s2, %s178
        %s180 = smul.u32 8, %s17
        %v181 = vld [vmem:[%s153] sm:$0xff]
        %v182 = vld [vmem:[%s153 + $0x8] sm:$0xff]
        %v183 = vld [vmem:[%s153 + $0x10] sm:$0xff]
        %v184 = vld [vmem:[%s153 + $0x18] sm:$0xff]
        %v185 = vld [vmem:[%s153 + $0x20] sm:$0xff]
        %v186 = vld [vmem:[%s153 + $0x28] sm:$0xff]
        %v187 = vld [vmem:[%s153 + $0x30] sm:$0xff]
        %v188 = vld [vmem:[%s153 + $0x38] sm:$0xff]
        %v189 = vld [vmem:[#allocation2] sm:$0xff]
        %v190 = vld [vmem:[#allocation2 + $0x8] sm:$0xff]
        %vm191 = vcmask 130048
        %v193 = vsel %vm191, %v181, 0
        %v196 = vsel %vm191, %v182, 0
        %v199 = vsel %vm191, %v183, 0
        %v202 = vsel %vm191, %v184, 0
        %v205 = vsel %vm191, %v185, 0
        %v208 = vsel %vm191, %v186, 0
        %v211 = vsel %vm191, %v187, 0
        %v214 = vsel %vm191, %v188, 0
        %216 = vmatprep.subr.mxu0 0.0
        %217 = vmatpush1.msra.mxu0 %v189
        %218 = vmatprep.subr.mxu0 0.0
        %219 = vmatpush1.msra.mxu0 %v190
        %220 = vmatprep.subr.mxu0 0.0
        %221 = vmatpush1.msra.mxu0 0.0
        %222 = vmatprep.subr.mxu0 0.0
        %223 = vmatpush1.msra.mxu0 0.0
        %224 = vmatprep.subr.mxu0 0.0
        %225 = vmatpush1.msra.mxu0 0.0
        %226 = vmatprep.subr.mxu0 0.0
        %227 = vmatpush1.msra.mxu0 0.0
        %228 = vmatprep.subr.mxu0 0.0
        %229 = vmatpush1.msra.mxu0 0.0
        %230 = vmatprep.subr.mxu0 0.0
        %231 = vmatpush1.msra.mxu0 0.0
        %232 = vmatprep.subr.mxu0 0.0
        %233 = vmatpush1.msra.mxu0 0.0
        %234 = vmatprep.subr.mxu0 0.0
        %235 = vmatpush1.msra.mxu0 0.0
        %236 = vmatprep.subr.mxu0 0.0
        %237 = vmatpush1.msra.mxu0 0.0
        %238 = vmatprep.subr.mxu0 0.0
        %239 = vmatpush1.msra.mxu0 0.0
        %240 = vmatprep.subr.mxu0 0.0
        %241 = vmatpush1.msra.mxu0 0.0
        %242 = vmatprep.subr.mxu0 0.0
        %243 = vmatpush1.msra.mxu0 0.0
        %244 = vmatprep.subr.mxu0 0.0
        %245 = vmatpush1.msra.mxu0 0.0
        %246 = vmatprep.subr.mxu0 0.0
        %247 = vmatpush1.msra.mxu0 0.0
        %248 = vmatprep.subr.mxu0 0.0
        %249 = vmatpush1.msra.mxu0 0.0
        %250 = vmatprep.subr.mxu0 0.0
        %251 = vmatpush1.msra.mxu0 0.0
        %252 = vmatprep.subr.mxu0 0.0
        %253 = vmatpush1.msra.mxu0 0.0
        %254 = vmatprep.subr.mxu0 0.0
        %255 = vmatpush1.msra.mxu0 0.0
        %256 = vmatprep.subr.mxu0 0.0
        %257 = vmatpush1.msra.mxu0 0.0
        %258 = vmatprep.subr.mxu0 0.0
        %259 = vmatpush1.msra.mxu0 0.0
        %260 = vmatprep.subr.mxu0 0.0
        %261 = vmatpush1.msra.mxu0 0.0
        %262 = vmatprep.subr.mxu0 0.0
        %263 = vmatpush1.msra.mxu0 0.0
        %264 = vmatprep.subr.mxu0 0.0
        %265 = vmatpush1.msra.mxu0 0.0
        %266 = vmatprep.subr.mxu0 0.0
        %267 = vmatpush1.msra.mxu0 0.0
        %268 = vmatprep.subr.mxu0 0.0
        %269 = vmatpush1.msra.mxu0 0.0
        %270 = vmatprep.subr.mxu0 0.0
        %271 = vmatpush1.msra.mxu0 0.0
        %272 = vmatprep.subr.mxu0 0.0
        %273 = vmatpush1.msra.mxu0 0.0
        %274 = vmatprep.subr.mxu0 0.0
        %275 = vmatpush1.msra.mxu0 0.0
        %276 = vmatprep.subr.mxu0 0.0
        %277 = vmatpush1.msra.mxu0 0.0
        %278 = vmatprep.subr.mxu0 0.0
        %279 = vmatpush1.msra.mxu0 0.0
        %280 = vmatprep.mubr.f32.mxu0 0.0
        %281 = vmatmul.mubr.f32.gmra.mrb[0].mxu0 %v193
        %v282 = vpop.f32.mrb[0].mxu0
        %v283 = vadd.f32 0.0, %v282
        %v284 = vpop.f32.mrb[0].mxu0
        %285 = vmatprep.mubr.f32.mxu0 0.0
        %286 = vmatmul.mubr.f32.gmra.mrb[0].mxu0 %v196
        %v287 = vpop.f32.mrb[0].mxu0
        %v288 = vadd.f32 0.0, %v287
        %v289 = vpop.f32.mrb[0].mxu0
        %290 = vmatprep.mubr.f32.mxu0 0.0
        %291 = vmatmul.mubr.f32.gmra.mrb[0].mxu0 %v199
        %v292 = vpop.f32.mrb[0].mxu0
        %v293 = vadd.f32 0.0, %v292
        %v294 = vpop.f32.mrb[0].mxu0
        %295 = vmatprep.mubr.f32.mxu0 0.0
        %296 = vmatmul.mubr.f32.gmra.mrb[0].mxu0 %v202
        %v297 = vpop.f32.mrb[0].mxu0
        %v298 = vadd.f32 0.0, %v297
        %v299 = vpop.f32.mrb[0].mxu0
        %300 = vmatprep.mubr.f32.mxu0 0.0
        %301 = vmatmul.mubr.f32.gmra.mrb[0].mxu0 %v205
        %v302 = vpop.f32.mrb[0].mxu0
        %v303 = vadd.f32 0.0, %v302
        %v304 = vpop.f32.mrb[0].mxu0
        %305 = vmatprep.mubr.f32.mxu0 0.0
        %306 = vmatmul.mubr.f32.gmra.mrb[0].mxu0 %v208
        %v307 = vpop.f32.mrb[0].mxu0
        %v308 = vadd.f32 0.0, %v307
        %v309 = vpop.f32.mrb[0].mxu0
        %310 = vmatprep.mubr.f32.mxu0 0.0
        %311 = vmatmul.mubr.f32.gmra.mrb[0].mxu0 %v211
        %v312 = vpop.f32.mrb[0].mxu0
        %v313 = vadd.f32 0.0, %v312
        %v314 = vpop.f32.mrb[0].mxu0
        %315 = vmatprep.mubr.f32.mxu0 0.0
        %316 = vmatmul.mubr.f32.gmra.mrb[0].mxu0 %v214
        %v317 = vpop.f32.mrb[0].mxu0
        %v318 = vadd.f32 0.0, %v317
        %v319 = vpop.f32.mrb[0].mxu0
        %320 = vdwg.mxu0
        %v321 = vrot.slane %v283, 7
        %v322 = vrot.slane %v288, 7
        %v323 = vrot.slane %v293, 7
        %v324 = vrot.slane %v298, 7
        %v325 = vrot.slane %v303, 7
        %v326 = vrot.slane %v308, 7
        %v327 = vrot.slane %v313, 7
        %v328 = vrot.slane %v318, 7
        %v329 = vlaneseq
        %v330 = vshrl.u32 %v329, 7
        %vm331 = vcmp.lt.s32.totalorder %v330, 1
        %v332 = vsel %vm331, %v327, %v328
        %v333 = vsel %vm331, %v326, %v327
        %v334 = vsel %vm331, %v325, %v326
        %v335 = vsel %vm331, %v324, %v325
        %v336 = vsel %vm331, %v323, %v324
        %v337 = vsel %vm331, %v322, %v323
        %v338 = vsel %vm331, %v321, %v322
        %v339 = vsel %vm331, %v328, %v321
        %v340 = vrot.slane %v283, 1
        %v341 = vrot.slane %v288, 1
        %v342 = vrot.slane %v293, 1
        %v343 = vrot.slane %v298, 1
        %v344 = vrot.slane %v303, 1
        %v345 = vrot.slane %v308, 1
        %v346 = vrot.slane %v313, 1
        %v347 = vrot.slane %v318, 1
        %vm348 = vcmp.lt.s32.totalorder %v330, 7
        %v349 = vsel %vm348, %v346, %v347
        %v350 = vsel %vm348, %v345, %v346
        %v351 = vsel %vm348, %v344, %v345
        %v352 = vsel %vm348, %v343, %v344
        %v353 = vsel %vm348, %v342, %v343
        %v354 = vsel %vm348, %v341, %v342
        %v355 = vsel %vm348, %v340, %v341
        %v356 = vsel %vm348, %v347, %v340
        %v357 = vadd.s32 %v330, 8
        %v358 = vadd.s32 %v330, 16
        %v359 = vadd.s32 %v330, 24
        %v360 = vadd.s32 %v330, 32
        %v361 = vadd.s32 %v330, 40
        %v362 = vadd.s32 %v330, 48
        %v363 = vadd.s32 %v330, 56
        %vm364 = vcmp.lt.s32.totalorder %v330, 0
        %v365 = vsub.s32 0, %v330
        %v366 = vsel %vm364, %v365, %v330
        %v367 = vshrl.u32 %v366, 4
        %v368 = vand.u32 %v366, 15
        %v369 = vsub.s32 0, %v368
        %v370 = vsel %vm364, %v369, %v368
        %vm371 = vcmp.lt.s32.totalorder %v357, 0
        %v372 = vsub.s32 0, %v357
        %v373 = vsel %vm371, %v372, %v357
        %v374 = vshrl.u32 %v373, 4
        %v375 = vand.u32 %v373, 15
        %v376 = vsub.s32 0, %v375
        %v377 = vsel %vm371, %v376, %v375
        %vm378 = vcmp.lt.s32.totalorder %v358, 0
        %v379 = vsub.s32 0, %v358
        %v380 = vsel %vm378, %v379, %v358
        %v381 = vshrl.u32 %v380, 4
        %v382 = vand.u32 %v380, 15
        %v383 = vsub.s32 0, %v382
        %v384 = vsel %vm378, %v383, %v382
        %vm385 = vcmp.lt.s32.totalorder %v359, 0
        %v386 = vsub.s32 0, %v359
        %v387 = vsel %vm385, %v386, %v359
        %v388 = vshrl.u32 %v387, 4
        %v389 = vand.u32 %v387, 15
        %v390 = vsub.s32 0, %v389
        %v391 = vsel %vm385, %v390, %v389
        %vm392 = vcmp.lt.s32.totalorder %v360, 0
        %v393 = vsub.s32 0, %v360
        %v394 = vsel %vm392, %v393, %v360
        %v395 = vshrl.u32 %v394, 4
        %v396 = vand.u32 %v394, 15
        %v397 = vsub.s32 0, %v396
        %v398 = vsel %vm392, %v397, %v396
        %vm399 = vcmp.lt.s32.totalorder %v361, 0
        %v400 = vsub.s32 0, %v361
        %v401 = vsel %vm399, %v400, %v361
        %v402 = vshrl.u32 %v401, 4
        %v403 = vand.u32 %v401, 15
        %v404 = vsub.s32 0, %v403
        %v405 = vsel %vm399, %v404, %v403
        %vm406 = vcmp.lt.s32.totalorder %v362, 0
        %v407 = vsub.s32 0, %v362
        %v408 = vsel %vm406, %v407, %v362
        %v409 = vshrl.u32 %v408, 4
        %v410 = vand.u32 %v408, 15
        %v411 = vsub.s32 0, %v410
        %v412 = vsel %vm406, %v411, %v410
        %vm413 = vcmp.lt.s32.totalorder %v363, 0
        %v414 = vsub.s32 0, %v363
        %v415 = vsel %vm413, %v414, %v363
        %v416 = vshrl.u32 %v415, 4
        %v417 = vand.u32 %v415, 15
        %v418 = vsub.s32 0, %v417
        %v419 = vsel %vm413, %v418, %v417
        %vm420 = vcmp.eq.s32.totalorder %v370, 0
        %vm421 = vcmp.eq.s32.totalorder %v377, 0
        %vm422 = vcmp.eq.s32.totalorder %v384, 0
        %vm423 = vcmp.eq.s32.totalorder %v391, 0
        %vm424 = vcmp.eq.s32.totalorder %v398, 0
        %vm425 = vcmp.eq.s32.totalorder %v405, 0
        %vm426 = vcmp.eq.s32.totalorder %v412, 0
        %vm427 = vcmp.eq.s32.totalorder %v419, 0
        %v428 = vsel %vm420, %v283, %v339
        %v429 = vsel %vm421, %v288, %v338
        %v430 = vsel %vm422, %v293, %v337
        %v431 = vsel %vm423, %v298, %v336
        %v432 = vsel %vm424, %v303, %v335
        %v433 = vsel %vm425, %v308, %v334
        %v434 = vsel %vm426, %v313, %v333
        %v435 = vsel %vm427, %v318, %v332
        %vm436 = vcmp.eq.s32.totalorder %v370, 15
        %vm437 = vcmp.eq.s32.totalorder %v377, 15
        %vm438 = vcmp.eq.s32.totalorder %v384, 15
        %vm439 = vcmp.eq.s32.totalorder %v391, 15
        %vm440 = vcmp.eq.s32.totalorder %v398, 15
        %vm441 = vcmp.eq.s32.totalorder %v405, 15
        %vm442 = vcmp.eq.s32.totalorder %v412, 15
        %vm443 = vcmp.eq.s32.totalorder %v419, 15
        %v444 = vsel %vm436, %v283, %v355
        %v445 = vsel %vm437, %v288, %v354
        %v446 = vsel %vm438, %v293, %v353
        %v447 = vsel %vm439, %v298, %v352
        %v448 = vsel %vm440, %v303, %v351
        %v449 = vsel %vm441, %v308, %v350
        %v450 = vsel %vm442, %v313, %v349
        %v451 = vsel %vm443, %v318, %v356
        %v452 = vmul.f32 %v428, 0.25
        %v453 = vmul.f32 %v429, 0.25
        %v454 = vmul.f32 %v430, 0.25
        %v455 = vmul.f32 %v431, 0.25
        %v456 = vmul.f32 %v432, 0.25
        %v457 = vmul.f32 %v433, 0.25
        %v458 = vmul.f32 %v434, 0.25
        %v459 = vmul.f32 %v435, 0.25
        %v460 = vmul.f32 %v283, 0.75
        %v461 = vmul.f32 %v288, 0.75
        %v462 = vmul.f32 %v293, 0.75
        %v463 = vmul.f32 %v298, 0.75
        %v464 = vmul.f32 %v303, 0.75
        %v465 = vmul.f32 %v308, 0.75
        %v466 = vmul.f32 %v313, 0.75
        %v467 = vmul.f32 %v318, 0.75
        %v468 = vadd.f32 %v452, %v460
        %v469 = vadd.f32 %v453, %v461
        %v470 = vadd.f32 %v454, %v462
        %v471 = vadd.f32 %v455, %v463
        %v472 = vadd.f32 %v456, %v464
        %v473 = vadd.f32 %v457, %v465
        %v474 = vadd.f32 %v458, %v466
        %v475 = vadd.f32 %v459, %v467
        %v476 = vmul.f32 %v444, 0.25
        %v477 = vmul.f32 %v445, 0.25
        %v478 = vmul.f32 %v446, 0.25
        %v479 = vmul.f32 %v447, 0.25
        %v480 = vmul.f32 %v448, 0.25
        %v481 = vmul.f32 %v449, 0.25
        %v482 = vmul.f32 %v450, 0.25
        %v483 = vmul.f32 %v451, 0.25
        %v484 = vadd.f32 %v460, %v476
        %v485 = vadd.f32 %v461, %v477
        %v486 = vadd.f32 %v462, %v478
        %v487 = vadd.f32 %v463, %v479
        %v488 = vadd.f32 %v464, %v480
        %v489 = vadd.f32 %v465, %v481
        %v490 = vadd.f32 %v466, %v482
        %v491 = vadd.f32 %v467, %v483
        %500 = vrot.lane.b32.xlu0 %v484, 32
        %v501 = vpop.permute.xlu0 %500
        %502 = vrot.lane.b32.xlu0 %v485, 32
        %v503 = vpop.permute.xlu0 %502
        %504 = vrot.lane.b32.xlu0 %v486, 32
        %v505 = vpop.permute.xlu0 %504
        %506 = vrot.lane.b32.xlu0 %v487, 32
        %v507 = vpop.permute.xlu0 %506
        %508 = vrot.lane.b32.xlu0 %v488, 32
        %v509 = vpop.permute.xlu0 %508
        %510 = vrot.lane.b32.xlu0 %v489, 32
        %v511 = vpop.permute.xlu0 %510
        %512 = vrot.lane.b32.xlu0 %v490, 32
        %v513 = vpop.permute.xlu0 %512
        %514 = vrot.lane.b32.xlu0 %v491, 32
        %v515 = vpop.permute.xlu0 %514
        %vm524 = vcmask 261120
        %v525 = vsel %vm524, %v468, %v501
        %v526 = vsel %vm524, %v469, %v503
        %v527 = vsel %vm524, %v470, %v505
        %v528 = vsel %vm524, %v471, %v507
        %v529 = vsel %vm524, %v472, %v509
        %v530 = vsel %vm524, %v473, %v511
        %v531 = vsel %vm524, %v474, %v513
        %v532 = vsel %vm524, %v475, %v515
        %vm533 = vcmask 523264
        %534 = vst.msk [vmem:[%s179] sm:$0xff] %vm533, %v525
        %535 = vst.msk [vmem:[%s179 + $0x8] sm:$0xff] %vm533, %v526
        %536 = vst.msk [vmem:[%s179 + $0x10] sm:$0xff] %vm533, %v527
        %537 = vst.msk [vmem:[%s179 + $0x18] sm:$0xff] %vm533, %v528
        %538 = vst.msk [vmem:[%s179 + $0x20] sm:$0xff] %vm533, %v529
        %539 = vst.msk [vmem:[%s179 + $0x28] sm:$0xff] %vm533, %v530
        %540 = vst.msk [vmem:[%s179 + $0x30] sm:$0xff] %vm533, %v531
        %541 = vst.msk [vmem:[%s179 + $0x38] sm:$0xff] %vm533, %v532
        %s542 = smul.u32 8, %s17
        %p543 = scmp.lt.s32.totalorder %s542, 15
        %s544 = scalar_select %p543, %s542, 15
        %s545 = smul.addr %s544, 8
        %s546 = scalar_lea.vmem %s2, %s545
        // Predicated region
        $region37: #{interpolate_module.1} parent=27 // pred_check
          %p547 = pneg %p82
        $region38: #{interpolate_module.1} parent=27 // pred_check_branch
          %549 = sbr.rel (%p547) target = $region40
        $region39: #{interpolate_module.1} parent=27 // pred_region
          %s550 = smul.u32 8, %s17
        $region40: #{interpolate_module.1} parent=27 // pred_fallthru
          _
      $region28: #{interpolate_module.1} parent=5 // pred_fallthru
        _
      %p551 = scmp.le.s32.totalorder 2, %s12
      // Predicated region
      $region41: #{interpolate_module.1} parent=5 // pred_check
        %p552 = pneg %p551
      $region42: #{interpolate_module.1} parent=5 // pred_check_branch
        %554 = sbr.rel (%p552) target = $region44
      $region43: #{interpolate_module.1} parent=5 // pred_region
        %s555 = ssub.s32 %s12, 2
        // Predicated region
        $region45: #{interpolate_module.1} parent=43 // pred_check
          %p556 = pneg %p88
        $region46: #{interpolate_module.1} parent=43 // pred_check_branch
          %558 = sbr.rel (%p556) target = $region48
        $region47: #{interpolate_module.1} parent=43 // pred_region
          %s559 = smul.u32 8, %s18
          %p560 = scmp.lt.s32.totalorder %s559, 15
          %s561 = scalar_select %p560, %s559, 15
          %s562 = smul.addr %s561, 8
          %s563 = scalar_lea.vmem %s2, %s562
        $region48: #{interpolate_module.1} parent=43 // pred_fallthru
          _
      $region44: #{interpolate_module.1} parent=5 // pred_fallthru
        _
    $region6: #{interpolate_module.1} parent=1 // loop_footer
      %s16 = sadd.s32 1, %s12
    $region7: #{interpolate_module.1} parent=1 // loop_footer_branch
      %11 = sbr.rel target = $region3
    $region8: #{interpolate_module.1} parent=1 // loop_exit
      _
    %564 = vsyncpa [#allocation3], 1
    %s565 = scalar_lea.sflag [#allocation3], 1
    %566 = vsyncpa %s565, 1
    %567 = vsyncpa [#allocation5], 1
    %s568 = scalar_lea.sflag [#allocation5], 1
    %569 = vsyncpa %s568, 1

</llo_original>
